<compile_context>
chip_gen: v6e
topology: v6e:2x2x1
jax: 0.10.0
libtpu: 0.0.40
codegen_flags: <defaults>
</compile_context>

<pallas_src>
import jax
import jax.numpy as jnp
from jax.experimental import pallas as pl
from jax.experimental.pallas import tpu as pltpu

LEAKY_SLOPE = 0.01   # nn.LeakyReLU default negative_slope
FOLD = 4             # batch rows folded per lane-dense super-row (4 * 32 = 128 lanes)


def _leaky_relu(x):
    # max(x, a*x) == LeakyReLU(x) for 0 < a < 1 (vmul+vmax, no vcmp/vsel).
    return jnp.maximum(x, LEAKY_SLOPE * x)


def image_encoder_kernel(x_ref, w1_ref, b1_ref, w2_ref, b2_ref, o_ref):
    """Fused 2-layer MLP hot path for one batch tile (bf16 MXU, f32 accumulate)."""
    h = jnp.dot(x_ref[...], w1_ref[...], preferred_element_type=jnp.float32)
    h = _leaky_relu(h + b1_ref[...])                  # [tb, FOLD*hidden], f32
    h = h.astype(jnp.bfloat16)                        # bf16 operand for 2nd MXU pass
    y = jnp.dot(h, w2_ref[...], preferred_element_type=jnp.float32) + b2_ref[...]
    o_ref[...] = _leaky_relu(y).astype(o_ref.dtype)   # [tb, FOLD*out], lane-dense store


def _block_diag(w, fold):
    """[in, out] -> [fold*in, fold*out] block-diagonal replication (exact zeros off-block)."""
    in_d, out_d = w.shape
    eye = jnp.eye(fold, dtype=w.dtype)
    return jnp.einsum("fg,io->figo", eye, w).reshape(fold * in_d, fold * out_d)


def prepare_params(params, fold=FOLD):
    """One-time weight prep (call at parameter-load time; reuse the result).

    Splits nothing (concat is fused via a single merged x), but expands W1/W2
    block-diagonally for the batch fold and casts them to bf16. Biases stay f32.
    """
    w1, b1, w2, b2 = params                           # PyTorch Linear layout: W[out, in]
    w1bd = _block_diag(w1.T.astype(jnp.bfloat16), fold)   # [fold*in,     fold*hidden]
    w2bd = _block_diag(w2.T.astype(jnp.bfloat16), fold)   # [fold*hidden, fold*out]
    b1bd = jnp.tile(b1.astype(jnp.float32), fold)[None, :]    # [1, fold*hidden]
    b2bd = jnp.tile(b2.astype(jnp.float32), fold)[None, :]    # [1, fold*out]
    return w1bd, b1bd, w2bd, b2bd


def image_encoder(img_embs, category_embs, price_embs, params, *,
                  prepared=None, block_rows=32768, min_pallas_batch=2048):
    """Wrapper: layout plumbing only (concat+cast, free fold reshape, tile sizing)."""
    B = img_embs.shape[0]

    # Small-batch fast path: launch + one-time weight DMA dominate; fused XLA wins.
    if B < min_pallas_batch:
        return reference_forward(img_embs, category_embs, price_embs, params)

    if prepared is None:
        prepared = prepare_params(params)
    w1bd, b1bd, w2bd, b2bd = prepared
    out_dim = b2bd.shape[1] // FOLD

    # Merge streams + cast to bf16 (fuses in XLA; producer would ideally emit bf16).
    x = jnp.concatenate([img_embs, category_embs, price_embs], axis=1)
    pad = (-B) % FOLD
    if pad:
        x = jnp.pad(x, ((0, pad), (0, 0)))
    x = x.astype(jnp.bfloat16)
    Bp = B + pad
    B4 = Bp // FOLD
    in_dim = x.shape[1]
    x4 = x.reshape(B4, FOLD * in_dim)                 # free: contiguous row-major fold

    # Batch tile (in super-rows): big enough to amortize ~0.35us/step overhead,
    # clamped so the grid has >=2 steps (v7x 2-TC sharding) and to a multiple
    # of 8 (sublane rule). A single full-extent block is legal at any row count.
    tb = min(max(block_rows // FOLD, 8), pl.cdiv(B4, 2))
    tb = ((tb + 7) // 8) * 8
    if tb >= B4:
        tb = B4
    grid = (pl.cdiv(B4, tb),)

    def _resident(arr):
        # Grid-invariant block: DMA'd once, held resident in VMEM across all steps.
        return pl.BlockSpec(arr.shape, lambda i: (0, 0))

    out4 = pl.pallas_call(
        image_encoder_kernel,
        out_shape=jax.ShapeDtypeStruct((B4, FOLD * out_dim), jnp.float32),
        grid_spec=pltpu.PrefetchScalarGridSpec(
            num_scalar_prefetch=0,
            grid=grid,
            in_specs=[
                pl.BlockSpec((tb, FOLD * in_dim), lambda i: (i, 0)),
                _resident(w1bd),
                _resident(b1bd),
                _resident(w2bd),
                _resident(b2bd),
            ],
            out_specs=pl.BlockSpec((tb, FOLD * out_dim), lambda i: (i, 0)),
        ),
        compiler_params=pltpu.CompilerParams(
            dimension_semantics=("parallel",),        # shard batch across TCs (v7x)
            vmem_limit_bytes=48 * 1024 * 1024,        # headroom under v7x's 64 MiB/TC
        ),
    )(x4, w1bd, b1bd, w2bd, b2bd)

    out = out4.reshape(Bp, out_dim)                   # free: contiguous row-major unfold
    return out[:B] if pad else out


def init_params(key, input_dim, hidden_dim, output_dim):
    """Deterministic synthetic init mimicking nn.Linear's uniform(-1/sqrt(fan_in), +)."""
    k1, k2, k3, k4 = jax.random.split(key, 4)
    bound1 = 1.0 / jnp.sqrt(input_dim)
    bound2 = 1.0 / jnp.sqrt(hidden_dim)
    w1 = jax.random.uniform(k1, (hidden_dim, input_dim), jnp.float32, -bound1, bound1)
    b1 = jax.random.uniform(k2, (hidden_dim,), jnp.float32, -bound1, bound1)
    w2 = jax.random.uniform(k3, (output_dim, hidden_dim), jnp.float32, -bound2, bound2)
    b2 = jax.random.uniform(k4, (output_dim,), jnp.float32, -bound2, bound2)
    return w1, b1, w2, b2


def reference_forward(img_embs, category_embs, price_embs, params):
    """Pure-JAX f32 reference mirroring the PyTorch module (eval mode)."""
    w1, b1, w2, b2 = params
    x = jnp.concatenate([img_embs, category_embs, price_embs], axis=1)
    h = _leaky_relu(x @ w1.T + b1)
    return _leaky_relu(h @ w2.T + b2)


def quantized_reference(img_embs, category_embs, price_embs, params):
    """Reference with the exact bf16-operand / f32-accumulate recipe of the kernel."""
    w1, b1, w2, b2 = params
    bf = lambda a: a.astype(jnp.bfloat16).astype(jnp.float32)
    x = bf(jnp.concatenate([img_embs, category_embs, price_embs], axis=1))
    h = _leaky_relu(x @ bf(w1).T + b1)
    h = bf(h)
    return _leaky_relu(h @ bf(w2).T + b2)


if __name__ == "__main__":
    # Small shapes consistent with the module's constructor.
    batch = 32
    input_emb_dim = 16
    input_category_dim = 8
    input_price_dim = 8
    input_dim = input_emb_dim + input_category_dim + input_price_dim  # 32
    hidden_dim = 64
    output_dim = 32

    key = jax.random.PRNGKey(0)
    k_img, k_cat, k_price, k_params = jax.random.split(key, 4)

    img_embs = jax.random.normal(k_img, (batch, input_emb_dim), jnp.float32)
    category_embs = jax.random.normal(k_cat, (batch, input_category_dim), jnp.float32)
    price_embs = jax.random.normal(k_price, (batch, input_price_dim), jnp.float32)

    params = init_params(k_params, input_dim, hidden_dim, output_dim)
    prepared = prepare_params(params)                 # one-time weight expansion + bf16 cast

    # Force the Pallas path at this small demo batch (fallback threshold -> 0).
    out = image_encoder(img_embs, category_embs, price_embs, params,
                        prepared=prepared, min_pallas_batch=0)
    out = jax.block_until_ready(out)
    assert out.shape == (batch, output_dim)

    ref_q = quantized_reference(img_embs, category_embs, price_embs, params)
    ref_f32 = reference_forward(img_embs, category_embs, price_embs, params)
    # Tight check vs. same-precision (bf16-operand) math; loose check vs. pure f32.
    assert jnp.allclose(out, ref_q, atol=1e-3, rtol=1e-3), \
        float(jnp.max(jnp.abs(out - ref_q)))
    assert jnp.allclose(out, ref_f32, atol=5e-2, rtol=5e-2), \
        float(jnp.max(jnp.abs(out - ref_f32)))

    # Default call exercises the small-batch XLA fallback (B=32 < 2048 rows).
    out_fb = image_encoder(img_embs, category_embs, price_embs, params, prepared=prepared)
    out_fb = jax.block_until_ready(out_fb)
    assert jnp.allclose(out_fb, ref_f32, atol=1e-5, rtol=1e-5)

    print("KERNEL_OK")
</pallas_src>

<mosaic_0001>
module attributes {stable_mosaic.version = 11 : i64} {
  func.func @image_encoder_kernel(%arg0: i32, %arg1: memref<8x128xbf16, #tpu.memory_space<vmem>>, %arg2: memref<128x256xbf16, #tpu.memory_space<vmem>>, %arg3: memref<1x256xf32, #tpu.memory_space<vmem>>, %arg4: memref<256x128xbf16, #tpu.memory_space<vmem>>, %arg5: memref<1x128xf32, #tpu.memory_space<vmem>>, %arg6: memref<8x128xf32, #tpu.memory_space<vmem>>) attributes {dimension_semantics = [#tpu.dimension_semantics<parallel>], iteration_bounds = array<i64: 1>, scalar_prefetch = 0 : i64, scratch_operands = 0 : i64, tpu.core_type = #tpu.core_type<tc>, window_params = [{transform_indices = @transform_0, window_bounds = array<i64: 8, 128>}, {pipeline_mode = #tpu.pipeline_mode<synchronous>, transform_indices = @transform_1, window_bounds = array<i64: 128, 256>}, {pipeline_mode = #tpu.pipeline_mode<synchronous>, transform_indices = @transform_2, window_bounds = array<i64: 1, 256>}, {pipeline_mode = #tpu.pipeline_mode<synchronous>, transform_indices = @transform_3, window_bounds = array<i64: 256, 128>}, {pipeline_mode = #tpu.pipeline_mode<synchronous>, transform_indices = @transform_4, window_bounds = array<i64: 1, 128>}, {transform_indices = @transform_5, window_bounds = array<i64: 8, 128>}]} {
    %c0 = arith.constant 0 : index
    %c0_0 = arith.constant 0 : index
    %0 = vector.load %arg1[%c0, %c0_0] : memref<8x128xbf16, #tpu.memory_space<vmem>>, vector<8x128xbf16>
    %c0_1 = arith.constant 0 : index
    %c0_2 = arith.constant 0 : index
    %1 = vector.load %arg2[%c0_1, %c0_2] : memref<128x256xbf16, #tpu.memory_space<vmem>>, vector<128x256xbf16>
    %cst = arith.constant dense<0.000000e+00> : vector<8x256xf32>
    %2 = tpu.matmul %0, %1, %cst {dimension_numbers = #tpu.dot_dimension_numbers<[1], [0], [0], [1], [0, 0, 1, 1], [], []>} : vector<8x128xbf16>, vector<128x256xbf16>, vector<8x256xf32> -> vector<8x256xf32>
    %c0_3 = arith.constant 0 : index
    %c0_4 = arith.constant 0 : index
    %3 = vector.load %arg3[%c0_3, %c0_4] : memref<1x256xf32, #tpu.memory_space<vmem>>, vector<1x256xf32>
    %4 = vector.broadcast %3 : vector<1x256xf32> to vector<8x256xf32>
    %5 = arith.addf %2, %4 : vector<8x256xf32>
    %cst_5 = arith.constant 0.00999999977 : f32
    %6 = vector.broadcast %cst_5 : f32 to vector<8x256xf32>
    %7 = arith.mulf %6, %5 : vector<8x256xf32>
    %8 = arith.maximumf %5, %7 : vector<8x256xf32>
    %9 = arith.truncf %8 : vector<8x256xf32> to vector<8x256xbf16>
    %c0_6 = arith.constant 0 : index
    %c0_7 = arith.constant 0 : index
    %10 = vector.load %arg4[%c0_6, %c0_7] : memref<256x128xbf16, #tpu.memory_space<vmem>>, vector<256x128xbf16>
    %cst_8 = arith.constant dense<0.000000e+00> : vector<8x128xf32>
    %11 = tpu.matmul %9, %10, %cst_8 {dimension_numbers = #tpu.dot_dimension_numbers<[1], [0], [0], [1], [0, 0, 1, 1], [], []>} : vector<8x256xbf16>, vector<256x128xbf16>, vector<8x128xf32> -> vector<8x128xf32>
    %c0_9 = arith.constant 0 : index
    %c0_10 = arith.constant 0 : index
    %12 = vector.load %arg5[%c0_9, %c0_10] : memref<1x128xf32, #tpu.memory_space<vmem>>, vector<1x128xf32>
    %13 = vector.broadcast %12 : vector<1x128xf32> to vector<8x128xf32>
    %14 = arith.addf %11, %13 : vector<8x128xf32>
    %cst_11 = arith.constant 0.00999999977 : f32
    %15 = vector.broadcast %cst_11 : f32 to vector<8x128xf32>
    %16 = arith.mulf %15, %14 : vector<8x128xf32>
    %17 = arith.maximumf %14, %16 : vector<8x128xf32>
    %c0_12 = arith.constant 0 : index
    %c0_13 = arith.constant 0 : index
    %18 = vector.load %arg6[%c0_12, %c0_13] : memref<8x128xf32, #tpu.memory_space<vmem>>, vector<8x128xf32>
    tpu.vector_store %arg6[%c0_12, %c0_13], %17 {strides = array<i32>} : memref<8x128xf32, #tpu.memory_space<vmem>>, vector<8x128xf32>,
    return
  }
  func.func @transform_0(%arg0: i32) -> (i32, i32) {
    %c0_i32 = arith.constant 0 : i32
    %c0_i32_0 = arith.constant 0 : i32
    return %arg0, %c0_i32 : i32, i32
  }
  func.func @transform_1(%arg0: i32) -> (i32, i32) {
    %c0_i32 = arith.constant 0 : i32
    %c0_i32_0 = arith.constant 0 : i32
    %c0_i32_1 = arith.constant 0 : i32
    return %c0_i32, %c0_i32_0 : i32, i32
  }
  func.func @transform_2(%arg0: i32) -> (i32, i32) {
    %c0_i32 = arith.constant 0 : i32
    %c0_i32_0 = arith.constant 0 : i32
    %c0_i32_1 = arith.constant 0 : i32
    return %c0_i32, %c0_i32_0 : i32, i32
  }
  func.func @transform_3(%arg0: i32) -> (i32, i32) {
    %c0_i32 = arith.constant 0 : i32
    %c0_i32_0 = arith.constant 0 : i32
    %c0_i32_1 = arith.constant 0 : i32
    return %c0_i32, %c0_i32_0 : i32, i32
  }
  func.func @transform_4(%arg0: i32) -> (i32, i32) {
    %c0_i32 = arith.constant 0 : i32
    %c0_i32_0 = arith.constant 0 : i32
    %c0_i32_1 = arith.constant 0 : i32
    return %c0_i32, %c0_i32_0 : i32, i32
  }
  func.func @transform_5(%arg0: i32) -> (i32, i32) {
    %c0_i32 = arith.constant 0 : i32
    %c0_i32_0 = arith.constant 0 : i32
    return %arg0, %c0_i32 : i32, i32
  }
}

</mosaic_0001>

<llo_original>
// kernel: tpu_custom_call.1
$region0: #{tpu_custom_call.1}
  #allocation0 [shape = 'u32[]', space=smem, size = 0x4, offset = 0x4, fixed_abs, tag = 'smem constant byte address 0x4 - core index']
  #allocation1 [shape = 'u32[144,128]{1,0:T(1,128)}', space=vmem, size = 0x12000, scoped, tag = 'internal scratch']
  %s0 = inlined_call_operand.hbm [shape: bf16[8,128], index: 0, kind: input, shape index: {}]
  %s1 = inlined_call_operand.hbm [shape: bf16[128,256], index: 1, kind: input, shape index: {}]
  %s2 = inlined_call_operand.vmem [shape: f32[1,256], index: 2, kind: input, shape index: {}]
  %s3 = inlined_call_operand.hbm [shape: bf16[256,128], index: 3, kind: input, shape index: {}]
  %s4 = inlined_call_operand.vmem [shape: f32[1,128], index: 4, kind: input, shape index: {}]
  %s5 = inlined_call_operand.hbm [shape: f32[8,128], index: 5, kind: output, shape index: {}]
  %s6 = sld [smem:[#allocation0]]
  $region42: #{tpu_custom_call.1} parent=0
    _
  %s8 = ssub.s32 1, %s6
  %s9 = scalar_select 0, %s8, %s6
  $region1: #{tpu_custom_call.1} parent=0
    #allocation2 [shape = 'u8[2048]{0}', space=vmem, size = 0x800, scoped, tag = 'input window, operand 0, single buffered']
    #allocation3 [shape = 's32[1]{0}', space=sflag, size = 0x4, scoped, tag = 'scoped memory for tpu_custom_call.1']
    #allocation4 [shape = 's32[1]{0}', space=sflag, size = 0x4, scoped, tag = 'scoped memory for tpu_custom_call.1']
    #allocation5 [shape = 'u8[65536]{0}', space=vmem, size = 0x10000, scoped, tag = 'input window, operand 1, single buffered']
    #allocation6 [shape = 's32[1]{0}', space=sflag, size = 0x4, scoped, tag = 'scoped memory for tpu_custom_call.1']
    #allocation7 [shape = 'u8[65536]{0}', space=vmem, size = 0x10000, scoped, tag = 'input window, operand 3, single buffered']
    #allocation8 [shape = 'u8[4096]{0}', space=vmem, size = 0x1000, scoped, tag = 'output window, operand 0, single buffered']
    %10 = vsyncpa [#allocation3], 0
    %11 = vsyncpa [#allocation6], 0
    %12 = vsyncpa [#allocation4], 0
    // Predicated region
    $region2: #{tpu_custom_call.1} parent=1 // pred_check
      _
    $region3: #{tpu_custom_call.1} parent=1 // pred_check_branch
      %14 = sbr.rel (0) target = $region5
    $region4: #{tpu_custom_call.1} parent=1 // pred_region
      %s16 = ssub.s32 64, 64
      %17 = vsyncadd [#allocation3], %s16
      %s19 = sshll.u32 [#allocation2], 4
      %s20 = int_to_ptr.vmem [resolvable:$true] %s19
      %22 = dma.hbm_to_vmem [thread:$0]  %s0, 64, %s20, [#allocation3]
    $region5: #{tpu_custom_call.1} parent=1 // pred_fallthru
      _
    // Predicated region
    $region6: #{tpu_custom_call.1} parent=1 // pred_check
      _
    $region7: #{tpu_custom_call.1} parent=1 // pred_check_branch
      %24 = sbr.rel (0) target = $region9
    $region8: #{tpu_custom_call.1} parent=1 // pred_region
      %s26 = ssub.s32 2048, 2048
      %27 = vsyncadd [#allocation6], %s26
      %s28 = sshll.u32 [#allocation5], 4
      %s29 = int_to_ptr.vmem [resolvable:$true] %s28
      %34 = dma.hbm_to_vmem [thread:$0]  %s1, 2048, %s29, [#allocation6], 128, 128, 8
    $region9: #{tpu_custom_call.1} parent=1 // pred_fallthru
      _
    // Predicated region
    $region10: #{tpu_custom_call.1} parent=1 // pred_check
      _
    $region11: #{tpu_custom_call.1} parent=1 // pred_check_branch
      %36 = sbr.rel (0) target = $region13
    $region12: #{tpu_custom_call.1} parent=1 // pred_region
      _
    $region13: #{tpu_custom_call.1} parent=1 // pred_fallthru
      _
    // Predicated region
    $region14: #{tpu_custom_call.1} parent=1 // pred_check
      _
    $region15: #{tpu_custom_call.1} parent=1 // pred_check_branch
      %38 = sbr.rel (0) target = $region17
    $region16: #{tpu_custom_call.1} parent=1 // pred_region
      %s40 = ssub.s32 2048, 2048
      %41 = vsyncadd [#allocation6], %s40
      %s42 = sshll.u32 [#allocation7], 4
      %s43 = int_to_ptr.vmem [resolvable:$true] %s42
      %48 = dma.hbm_to_vmem [thread:$0]  %s3, 2048, %s43, [#allocation6], 64, 64, 4
    $region17: #{tpu_custom_call.1} parent=1 // pred_fallthru
      _
    // Predicated region
    $region18: #{tpu_custom_call.1} parent=1 // pred_check
      _
    $region19: #{tpu_custom_call.1} parent=1 // pred_check_branch
      %50 = sbr.rel (0) target = $region21
    $region20: #{tpu_custom_call.1} parent=1 // pred_region
      _
    $region21: #{tpu_custom_call.1} parent=1 // pred_fallthru
      _
    // Predicated region
    $region22: #{tpu_custom_call.1} parent=1 // pred_check
      _
    $region23: #{tpu_custom_call.1} parent=1 // pred_check_branch
      %52 = sbr.rel (0) target = $region25
    $region24: #{tpu_custom_call.1} parent=1 // pred_region
      %53 = dma.done [#allocation3], 64
    $region25: #{tpu_custom_call.1} parent=1 // pred_fallthru
      _
    // Predicated region
    $region26: #{tpu_custom_call.1} parent=1 // pred_check
      _
    $region27: #{tpu_custom_call.1} parent=1 // pred_check_branch
      %55 = sbr.rel (0) target = $region29
    $region28: #{tpu_custom_call.1} parent=1 // pred_region
      %56 = dma.done [#allocation6], 2048
    $region29: #{tpu_custom_call.1} parent=1 // pred_fallthru
      _
    // Predicated region
    $region30: #{tpu_custom_call.1} parent=1 // pred_check
      _
    $region31: #{tpu_custom_call.1} parent=1 // pred_check_branch
      %58 = sbr.rel (0) target = $region33
    $region32: #{tpu_custom_call.1} parent=1 // pred_region
      %59 = dma.done [#allocation6], 2048
    $region33: #{tpu_custom_call.1} parent=1 // pred_fallthru
      _
    %v61 = vld [vmem:[#allocation2] sm:$0xf]
    %v62 = vld [vmem:[#allocation5] sm:$0xff]
    %v63 = vld [vmem:[#allocation5 + $0x8] sm:$0xff]
    %v64 = vld [vmem:[#allocation5 + $0x10] sm:$0xff]
    %v65 = vld [vmem:[#allocation5 + $0x18] sm:$0xff]
    %v66 = vld [vmem:[#allocation5 + $0x20] sm:$0xff]
    %v67 = vld [vmem:[#allocation5 + $0x28] sm:$0xff]
    %v68 = vld [vmem:[#allocation5 + $0x30] sm:$0xff]
    %v69 = vld [vmem:[#allocation5 + $0x38] sm:$0xff]
    %v70 = vld [vmem:[#allocation5 + $0x40] sm:$0xff]
    %v71 = vld [vmem:[#allocation5 + $0x48] sm:$0xff]
    %v72 = vld [vmem:[#allocation5 + $0x50] sm:$0xff]
    %v73 = vld [vmem:[#allocation5 + $0x58] sm:$0xff]
    %v74 = vld [vmem:[#allocation5 + $0x60] sm:$0xff]
    %v75 = vld [vmem:[#allocation5 + $0x68] sm:$0xff]
    %v76 = vld [vmem:[#allocation5 + $0x70] sm:$0xff]
    %v77 = vld [vmem:[#allocation5 + $0x78] sm:$0xff]
    %v78 = vld [vmem:[%s2] sm:$0x3]
    %v80 = vlaneseq
    %v81 = vshrl.u32 %v80, 7
    %v82 = vsub.s32 0, %v81
    %v83 = vrot.slane %v78, %v82
    %v84 = vlaneseq
    %v85 = vshrl.u32 %v84, 7
    %v86 = vsub.s32 1, %v85
    %v87 = vrot.slane %v78, %v86
    %v106 = vunpack.c.l.b16 %v62
    %v107 = vunpack.c.h.b16 %v62
    %v108 = vunpack.c.l.b16 %v63
    %v109 = vunpack.c.h.b16 %v63
    %v110 = vunpack.c.l.b16 %v64
    %v111 = vunpack.c.h.b16 %v64
    %v112 = vunpack.c.l.b16 %v65
    %v113 = vunpack.c.h.b16 %v65
    %v114 = vunpack.c.l.b16 %v66
    %v115 = vunpack.c.h.b16 %v66
    %v116 = vunpack.c.l.b16 %v67
    %v117 = vunpack.c.h.b16 %v67
    %v118 = vunpack.c.l.b16 %v68
    %v119 = vunpack.c.h.b16 %v68
    %v120 = vunpack.c.l.b16 %v69
    %v121 = vunpack.c.h.b16 %v69
    %v122 = vunpack.c.l.b16 %v70
    %v123 = vunpack.c.h.b16 %v70
    %v124 = vunpack.c.l.b16 %v71
    %v125 = vunpack.c.h.b16 %v71
    %v126 = vunpack.c.l.b16 %v72
    %v127 = vunpack.c.h.b16 %v72
    %v128 = vunpack.c.l.b16 %v73
    %v129 = vunpack.c.h.b16 %v73
    %v130 = vunpack.c.l.b16 %v74
    %v131 = vunpack.c.h.b16 %v74
    %v132 = vunpack.c.l.b16 %v75
    %v133 = vunpack.c.h.b16 %v75
    %v134 = vunpack.c.l.b16 %v76
    %v135 = vunpack.c.h.b16 %v76
    %v136 = vunpack.c.l.b16 %v77
    %v137 = vunpack.c.h.b16 %v77
    %v138 = vpack.c.b16 %v108, %v106
    %v139 = vpack.c.b16 %v109, %v107
    %v140 = vpack.c.b16 %v112, %v110
    %v141 = vpack.c.b16 %v113, %v111
    %v142 = vpack.c.b16 %v116, %v114
    %v143 = vpack.c.b16 %v117, %v115
    %v144 = vpack.c.b16 %v120, %v118
    %v145 = vpack.c.b16 %v121, %v119
    %v146 = vpack.c.b16 %v124, %v122
    %v147 = vpack.c.b16 %v125, %v123
    %v148 = vpack.c.b16 %v128, %v126
    %v149 = vpack.c.b16 %v129, %v127
    %v150 = vpack.c.b16 %v132, %v130
    %v151 = vpack.c.b16 %v133, %v131
    %v152 = vpack.c.b16 %v136, %v134
    %v153 = vpack.c.b16 %v137, %v135
    %170 = vmatprep.subr.bf16.mxu0 %v153
    %171 = vmatpush1.bf16.msra.mxu0 %v152
    %172 = vmatprep.subr.bf16.mxu0 %v151
    %173 = vmatpush1.bf16.msra.mxu0 %v150
    %174 = vmatprep.subr.bf16.mxu0 %v149
    %175 = vmatpush1.bf16.msra.mxu0 %v148
    %176 = vmatprep.subr.bf16.mxu0 %v147
    %177 = vmatpush1.bf16.msra.mxu0 %v146
    %178 = vmatprep.subr.bf16.mxu0 %v145
    %179 = vmatpush1.bf16.msra.mxu0 %v144
    %180 = vmatprep.subr.bf16.mxu0 %v143
    %181 = vmatpush1.bf16.msra.mxu0 %v142
    %182 = vmatprep.subr.bf16.mxu0 %v141
    %183 = vmatpush1.bf16.msra.mxu0 %v140
    %184 = vmatprep.subr.bf16.mxu0 %v139
    %185 = vmatpush1.bf16.msra.mxu0 %v138
    %186 = vmatprep.subr.bf16.mxu0 0
    %187 = vmatpush2.bf16.msra.mxu0 0
    %188 = vmatprep.subr.bf16.mxu0 0
    %189 = vmatpush2.bf16.msra.mxu0 0
    %190 = vmatprep.subr.bf16.mxu0 0
    %191 = vmatpush2.bf16.msra.mxu0 0
    %192 = vmatprep.subr.bf16.mxu0 0
    %193 = vmatpush2.bf16.msra.mxu0 0
    %194 = vmatprep.subr.bf16.mxu0 0
    %195 = vmatpush2.bf16.msra.mxu0 0
    %196 = vmatprep.subr.bf16.mxu0 0
    %197 = vmatpush2.bf16.msra.mxu0 0
    %198 = vmatprep.subr.bf16.mxu0 0
    %199 = vmatpush2.bf16.msra.mxu0 0
    %200 = vmatprep.subr.bf16.mxu0 0
    %201 = vmatpush2.bf16.msra.mxu0 0
    %202 = vmatprep.mubr.bf16.mxu0 0
    %203 = vmatmul.mubr.bf16.gmra.mxu0 %v61
    %v204 = vpop.f32.mrf.mxu0
    %v205 = vadd.f32 %v83, %v204
    %v206 = vpop.f32.mrf.mxu0
    %v207 = vadd.f32 %v87, %v206
    %v208 = vpop.f32.mrf.mxu0
    %v209 = vpop.f32.mrf.mxu0
    %210 = vdwg.mxu0
    %v211 = vmul.f32 %v205, 0.01
    %v212 = vmul.f32 %v207, 0.01
    %v213 = vmax.f32 %v205, %v211
    %v214 = vmax.f32 %v207, %v212
    %v215 = vpack.c.bf16 %v213, %v213
    %v216 = vpack.c.bf16 %v214, %v214
    %v217 = vld [vmem:[#allocation7] sm:$0xf]
    %v218 = vld [vmem:[#allocation7 + $0x4] sm:$0xf]
    %v219 = vld [vmem:[#allocation7 + $0x8] sm:$0xf]
    %v220 = vld [vmem:[#allocation7 + $0xc] sm:$0xf]
    %v221 = vld [vmem:[#allocation7 + $0x10] sm:$0xf]
    %v222 = vld [vmem:[#allocation7 + $0x14] sm:$0xf]
    %v223 = vld [vmem:[#allocation7 + $0x18] sm:$0xf]
    %v224 = vld [vmem:[#allocation7 + $0x1c] sm:$0xf]
    %v225 = vld [vmem:[#allocation7 + $0x20] sm:$0xf]
    %v226 = vld [vmem:[#allocation7 + $0x24] sm:$0xf]
    %v227 = vld [vmem:[#allocation7 + $0x28] sm:$0xf]
    %v228 = vld [vmem:[#allocation7 + $0x2c] sm:$0xf]
    %v229 = vld [vmem:[#allocation7 + $0x30] sm:$0xf]
    %v230 = vld [vmem:[#allocation7 + $0x34] sm:$0xf]
    %v231 = vld [vmem:[#allocation7 + $0x38] sm:$0xf]
    %v232 = vld [vmem:[#allocation7 + $0x3c] sm:$0xf]
    %v233 = vld [vmem:[#allocation7 + $0x40] sm:$0xf]
    %v234 = vld [vmem:[#allocation7 + $0x44] sm:$0xf]
    %v235 = vld [vmem:[#allocation7 + $0x48] sm:$0xf]
    %v236 = vld [vmem:[#allocation7 + $0x4c] sm:$0xf]
    %v237 = vld [vmem:[#allocation7 + $0x50] sm:$0xf]
    %v238 = vld [vmem:[#allocation7 + $0x54] sm:$0xf]
    %v239 = vld [vmem:[#allocation7 + $0x58] sm:$0xf]
    %v240 = vld [vmem:[#allocation7 + $0x5c] sm:$0xf]
    %v241 = vld [vmem:[#allocation7 + $0x60] sm:$0xf]
    %v242 = vld [vmem:[#allocation7 + $0x64] sm:$0xf]
    %v243 = vld [vmem:[#allocation7 + $0x68] sm:$0xf]
    %v244 = vld [vmem:[#allocation7 + $0x6c] sm:$0xf]
    %v245 = vld [vmem:[#allocation7 + $0x70] sm:$0xf]
    %v246 = vld [vmem:[#allocation7 + $0x74] sm:$0xf]
    %v247 = vld [vmem:[#allocation7 + $0x78] sm:$0xf]
    %v248 = vld [vmem:[#allocation7 + $0x7c] sm:$0xf]
    %v249 = vld [vmem:[%s4] sm:$0x1]
    %v251 = vlaneseq
    %v252 = vshrl.u32 %v251, 7
    %v253 = vsub.s32 0, %v252
    %v254 = vrot.slane %v249, %v253
    %v288 = vunpack.c.l.b16 %v217
    %v289 = vunpack.c.l.b16 %v218
    %v290 = vunpack.c.l.b16 %v219
    %v291 = vunpack.c.l.b16 %v220
    %v292 = vunpack.c.l.b16 %v221
    %v293 = vunpack.c.l.b16 %v222
    %v294 = vunpack.c.l.b16 %v223
    %v295 = vunpack.c.l.b16 %v224
    %v296 = vunpack.c.l.b16 %v225
    %v297 = vunpack.c.l.b16 %v226
    %v298 = vunpack.c.l.b16 %v227
    %v299 = vunpack.c.l.b16 %v228
    %v300 = vunpack.c.l.b16 %v229
    %v301 = vunpack.c.l.b16 %v230
    %v302 = vunpack.c.l.b16 %v231
    %v303 = vunpack.c.l.b16 %v232
    %v304 = vunpack.c.l.b16 %v233
    %v305 = vunpack.c.l.b16 %v234
    %v306 = vunpack.c.l.b16 %v235
    %v307 = vunpack.c.l.b16 %v236
    %v308 = vunpack.c.l.b16 %v237
    %v309 = vunpack.c.l.b16 %v238
    %v310 = vunpack.c.l.b16 %v239
    %v311 = vunpack.c.l.b16 %v240
    %v312 = vunpack.c.l.b16 %v241
    %v313 = vunpack.c.l.b16 %v242
    %v314 = vunpack.c.l.b16 %v243
    %v315 = vunpack.c.l.b16 %v244
    %v316 = vunpack.c.l.b16 %v245
    %v317 = vunpack.c.l.b16 %v246
    %v318 = vunpack.c.l.b16 %v247
    %v319 = vunpack.c.l.b16 %v248
    %v320 = vpack.c.b16 %v289, %v288
    %v321 = vpack.c.b16 %v291, %v290
    %v322 = vpack.c.b16 %v293, %v292
    %v323 = vpack.c.b16 %v295, %v294
    %v324 = vpack.c.b16 %v297, %v296
    %v325 = vpack.c.b16 %v299, %v298
    %v326 = vpack.c.b16 %v301, %v300
    %v327 = vpack.c.b16 %v303, %v302
    %v328 = vpack.c.b16 %v305, %v304
    %v329 = vpack.c.b16 %v307, %v306
    %v330 = vpack.c.b16 %v309, %v308
    %v331 = vpack.c.b16 %v311, %v310
    %v332 = vpack.c.b16 %v313, %v312
    %v333 = vpack.c.b16 %v315, %v314
    %v334 = vpack.c.b16 %v317, %v316
    %v335 = vpack.c.b16 %v319, %v318
    %352 = vmatprep.subr.bf16.mxu0 0
    %353 = vmatpush1.bf16.msra.mxu0 %v327
    %354 = vmatprep.subr.bf16.mxu0 0
    %355 = vmatpush1.bf16.msra.mxu0 %v326
    %356 = vmatprep.subr.bf16.mxu0 0
    %357 = vmatpush1.bf16.msra.mxu0 %v325
    %358 = vmatprep.subr.bf16.mxu0 0
    %359 = vmatpush1.bf16.msra.mxu0 %v324
    %360 = vmatprep.subr.bf16.mxu0 0
    %361 = vmatpush1.bf16.msra.mxu0 %v323
    %362 = vmatprep.subr.bf16.mxu0 0
    %363 = vmatpush1.bf16.msra.mxu0 %v322
    %364 = vmatprep.subr.bf16.mxu0 0
    %365 = vmatpush1.bf16.msra.mxu0 %v321
    %366 = vmatprep.subr.bf16.mxu0 0
    %367 = vmatpush1.bf16.msra.mxu0 %v320
    %368 = vmatprep.subr.bf16.mxu0 0
    %369 = vmatpush2.bf16.msra.mxu0 %v335
    %370 = vmatprep.subr.bf16.mxu0 0
    %371 = vmatpush2.bf16.msra.mxu0 %v334
    %372 = vmatprep.subr.bf16.mxu0 0
    %373 = vmatpush2.bf16.msra.mxu0 %v333
    %374 = vmatprep.subr.bf16.mxu0 0
    %375 = vmatpush2.bf16.msra.mxu0 %v332
    %376 = vmatprep.subr.bf16.mxu0 0
    %377 = vmatpush2.bf16.msra.mxu0 %v331
    %378 = vmatprep.subr.bf16.mxu0 0
    %379 = vmatpush2.bf16.msra.mxu0 %v330
    %380 = vmatprep.subr.bf16.mxu0 0
    %381 = vmatpush2.bf16.msra.mxu0 %v329
    %382 = vmatprep.subr.bf16.mxu0 0
    %383 = vmatpush2.bf16.msra.mxu0 %v328
    %384 = vmatprep.mubr.bf16.mxu0 %v216
    %385 = vmatmul.mubr.bf16.gmra.mxu0 %v215
    %v386 = vpop.f32.mrf.mxu0
    %v387 = vadd.f32 %v254, %v386
    %v388 = vpop.f32.mrf.mxu0
    %v389 = vpop.f32.mrf.mxu0
    %v390 = vpop.f32.mrf.mxu0
    %391 = vdwg.mxu0
    %v392 = vmul.f32 %v387, 0.01
    %v393 = vmax.f32 %v387, %v392
    %394 = vst [vmem:[#allocation8] sm:$0xff] %v393
    // Predicated region
    $region34: #{tpu_custom_call.1} parent=1 // pred_check
      _
    $region35: #{tpu_custom_call.1} parent=1 // pred_check_branch
      %396 = sbr.rel (0) target = $region37
    $region36: #{tpu_custom_call.1} parent=1 // pred_region
      %s398 = ssub.s32 128, 128
      %399 = vsyncadd [#allocation4], %s398
      %s401 = sshll.u32 [#allocation8], 4
      %s402 = int_to_ptr.vmem [resolvable:$true] %s401
      %404 = dma.vmem_to_hbm [thread:$0]  %s402, 128, %s5, [#allocation4]
    $region37: #{tpu_custom_call.1} parent=1 // pred_fallthru
      _
    // Predicated region
    $region38: #{tpu_custom_call.1} parent=1 // pred_check
      _
    $region39: #{tpu_custom_call.1} parent=1 // pred_check_branch
      %406 = sbr.rel (0) target = $region41
    $region40: #{tpu_custom_call.1} parent=1 // pred_region
      %407 = dma.done [#allocation4], 128
    $region41: #{tpu_custom_call.1} parent=1 // pred_fallthru
      _
    %408 = vsyncpa [#allocation3], 1
    %409 = vsyncpa [#allocation6], 1
    %410 = vsyncpa [#allocation4], 1

</llo_original>
